<compile_context>
chip_gen: v6e
topology: v6e:2x2x1
jax: 0.10.0
libtpu: 0.0.40
codegen_flags: <defaults>
</compile_context>

<pallas_src>
import functools

import jax
import jax.numpy as jnp
from jax.experimental import pallas as pl
from jax.experimental.pallas import tpu as pltpu

# ---------------- model dims (match nn.Module __init__) ----------------
STATE_SIZE = 4          # state_size argument of dumbnet (small, synthetic)
H1, H2, OUT = 10, 5, 2  # layer1 -> 10, layer2 -> 5, layer3 -> 2

SUB = 8                 # sublane granularity (second-to-last dim alignment)
DEFAULT_TB = 512        # batch rows per grid step (amortizes ~0.35 us/step overhead)


# ---------------- Pallas kernel: the whole MLP hot path ----------------
def mlp_kernel(x_ref, w1_ref, b1_ref, w2_ref, b2_ref, w3_ref, b3_ref, o_ref):
    x = x_ref[...]                                     # (TB, STATE_SIZE)
    # layer1 + ReLU
    h1 = jnp.dot(x, w1_ref[...], preferred_element_type=jnp.float32) + b1_ref[...]
    h1 = jnp.maximum(h1, 0.0)
    # layer2 + ReLU
    h2 = jnp.dot(h1, w2_ref[...], preferred_element_type=jnp.float32) + b2_ref[...]
    h2 = jnp.maximum(h2, 0.0)
    # layer3 (no activation) -> narrow (TB, OUT) store
    o_ref[...] = jnp.dot(h2, w3_ref[...], preferred_element_type=jnp.float32) + b3_ref[...]


def prepare_params(params):
    """One-time parameter preparation (hoisted out of the hot path).

    Weights stay unpadded as [in, out]; biases become 2-D [1, out] so they are
    clean full-block VMEM operands that broadcast over the batch tile.
    """
    w1, b1, w2, b2, w3, b3 = params
    return (w1, b1.reshape(1, -1), w2, b2.reshape(1, -1), w3, b3.reshape(1, -1))


@functools.partial(jax.jit, static_argnames=("tb",))
def dumbnet_forward(x, prepared, tb=DEFAULT_TB):
    """x: [B, STATE_SIZE] float32. Returns [B, OUT] float32."""
    w1, b1, w2, b2, w3, b3 = prepared
    B, S = x.shape

    # batch tile: multiple of 8 sublanes, never larger than the (rounded) batch
    b8 = ((B + SUB - 1) // SUB) * SUB
    tb = min(tb, b8)
    grid = pl.cdiv(B, tb)
    BP = grid * tb

    xp = jnp.pad(x, ((0, BP - B), (0, 0))) if BP != B else x

    const = lambda i: (0, 0)   # weights/biases: same block every step -> fetched once

    out = pl.pallas_call(
        mlp_kernel,
        out_shape=jax.ShapeDtypeStruct((BP, OUT), jnp.float32),
        grid=(grid,),
        in_specs=[
            pl.BlockSpec((tb, S), lambda i: (i, 0)),   # x tile (double-buffered DMA)
            pl.BlockSpec(w1.shape, const),             # (4, 10)  resident
            pl.BlockSpec(b1.shape, const),             # (1, 10)
            pl.BlockSpec(w2.shape, const),             # (10, 5)
            pl.BlockSpec(b2.shape, const),             # (1, 5)
            pl.BlockSpec(w3.shape, const),             # (5, 2)
            pl.BlockSpec(b3.shape, const),             # (1, 2)
        ],
        out_specs=pl.BlockSpec((tb, OUT), lambda i: (i, 0)),
        compiler_params=pltpu.CompilerParams(
            dimension_semantics=("parallel",),         # megacore-shardable on v7x
        ),
    )(xp, w1, b1, w2, b2, w3, b3)

    return out[:B] if BP != B else out


# ---------------- deterministic init + pure-JAX reference ----------------
def init_params(key):
    """Deterministic init mirroring nn.Linear shapes (stored as [in, out])."""
    ks = jax.random.split(key, 6)

    def linear(kw, kb, fan_in, fan_out):
        bound = 1.0 / jnp.sqrt(fan_in)
        w = jax.random.uniform(kw, (fan_in, fan_out), jnp.float32, -bound, bound)
        b = jax.random.uniform(kb, (fan_out,), jnp.float32, -bound, bound)
        return w, b

    w1, b1 = linear(ks[0], ks[1], STATE_SIZE, H1)
    w2, b2 = linear(ks[2], ks[3], H1, H2)
    w3, b3 = linear(ks[4], ks[5], H2, OUT)
    return (w1, b1, w2, b2, w3, b3)


def reference_forward(x, params):
    w1, b1, w2, b2, w3, b3 = params
    h1 = jnp.maximum(x @ w1 + b1, 0.0)
    h2 = jnp.maximum(h1 @ w2 + b2, 0.0)
    return h2 @ w3 + b3


if __name__ == "__main__":
    key = jax.random.PRNGKey(0)
    kx, kp = jax.random.split(key)
    B = 8
    x = jax.random.normal(kx, (B, STATE_SIZE), jnp.float32)
    params = init_params(kp)
    prepared = prepare_params(params)   # one-time prep, outside the hot path

    y = dumbnet_forward(x, prepared)
    y = jax.block_until_ready(y)

    y_ref = reference_forward(x, params)
    assert y.shape == (B, OUT)
    assert jnp.allclose(y, y_ref, atol=1e-5, rtol=1e-5)
    print("KERNEL_OK")
</pallas_src>

<mosaic_0001>
module attributes {stable_mosaic.version = 11 : i64} {
  func.func @mlp_kernel(%arg0: i32, %arg1: memref<8x4xf32, #tpu.memory_space<vmem>>, %arg2: memref<4x10xf32, #tpu.memory_space<vmem>>, %arg3: memref<1x10xf32, #tpu.memory_space<vmem>>, %arg4: memref<10x5xf32, #tpu.memory_space<vmem>>, %arg5: memref<1x5xf32, #tpu.memory_space<vmem>>, %arg6: memref<5x2xf32, #tpu.memory_space<vmem>>, %arg7: memref<1x2xf32, #tpu.memory_space<vmem>>, %arg8: memref<8x2xf32, #tpu.memory_space<vmem>>) attributes {dimension_semantics = [#tpu.dimension_semantics<parallel>], iteration_bounds = array<i64: 1>, scalar_prefetch = 0 : i64, scratch_operands = 0 : i64, tpu.core_type = #tpu.core_type<tc>, window_params = [{transform_indices = @transform_0, window_bounds = array<i64: 8, 4>}, {pipeline_mode = #tpu.pipeline_mode<synchronous>, transform_indices = @transform_1, window_bounds = array<i64: 4, 10>}, {pipeline_mode = #tpu.pipeline_mode<synchronous>, transform_indices = @transform_2, window_bounds = array<i64: 1, 10>}, {pipeline_mode = #tpu.pipeline_mode<synchronous>, transform_indices = @transform_3, window_bounds = array<i64: 10, 5>}, {pipeline_mode = #tpu.pipeline_mode<synchronous>, transform_indices = @transform_4, window_bounds = array<i64: 1, 5>}, {pipeline_mode = #tpu.pipeline_mode<synchronous>, transform_indices = @transform_5, window_bounds = array<i64: 5, 2>}, {pipeline_mode = #tpu.pipeline_mode<synchronous>, transform_indices = @transform_6, window_bounds = array<i64: 1, 2>}, {transform_indices = @transform_7, window_bounds = array<i64: 8, 2>}]} {
    %c0 = arith.constant 0 : index
    %c0_0 = arith.constant 0 : index
    %0 = vector.load %arg1[%c0, %c0_0] : memref<8x4xf32, #tpu.memory_space<vmem>>, vector<8x4xf32>
    %c0_1 = arith.constant 0 : index
    %c0_2 = arith.constant 0 : index
    %1 = vector.load %arg2[%c0_1, %c0_2] : memref<4x10xf32, #tpu.memory_space<vmem>>, vector<4x10xf32>
    %cst = arith.constant dense<0.000000e+00> : vector<8x10xf32>
    %2 = tpu.matmul %0, %1, %cst {dimension_numbers = #tpu.dot_dimension_numbers<[1], [0], [0], [1], [0, 0, 1, 1], [], []>} : vector<8x4xf32>, vector<4x10xf32>, vector<8x10xf32> -> vector<8x10xf32>
    %c0_3 = arith.constant 0 : index
    %c0_4 = arith.constant 0 : index
    %3 = vector.load %arg3[%c0_3, %c0_4] : memref<1x10xf32, #tpu.memory_space<vmem>>, vector<1x10xf32>
    %4 = vector.broadcast %3 : vector<1x10xf32> to vector<8x10xf32>
    %5 = arith.addf %2, %4 : vector<8x10xf32>
    %cst_5 = arith.constant 0.000000e+00 : f32
    %6 = vector.broadcast %cst_5 : f32 to vector<8x10xf32>
    %7 = arith.maximumf %5, %6 : vector<8x10xf32>
    %c0_6 = arith.constant 0 : index
    %c0_7 = arith.constant 0 : index
    %8 = vector.load %arg4[%c0_6, %c0_7] : memref<10x5xf32, #tpu.memory_space<vmem>>, vector<10x5xf32>
    %cst_8 = arith.constant dense<0.000000e+00> : vector<8x5xf32>
    %9 = tpu.matmul %7, %8, %cst_8 {dimension_numbers = #tpu.dot_dimension_numbers<[1], [0], [0], [1], [0, 0, 1, 1], [], []>} : vector<8x10xf32>, vector<10x5xf32>, vector<8x5xf32> -> vector<8x5xf32>
    %c0_9 = arith.constant 0 : index
    %c0_10 = arith.constant 0 : index
    %10 = vector.load %arg5[%c0_9, %c0_10] : memref<1x5xf32, #tpu.memory_space<vmem>>, vector<1x5xf32>
    %11 = vector.broadcast %10 : vector<1x5xf32> to vector<8x5xf32>
    %12 = arith.addf %9, %11 : vector<8x5xf32>
    %cst_11 = arith.constant 0.000000e+00 : f32
    %13 = vector.broadcast %cst_11 : f32 to vector<8x5xf32>
    %14 = arith.maximumf %12, %13 : vector<8x5xf32>
    %c0_12 = arith.constant 0 : index
    %c0_13 = arith.constant 0 : index
    %15 = vector.load %arg6[%c0_12, %c0_13] : memref<5x2xf32, #tpu.memory_space<vmem>>, vector<5x2xf32>
    %cst_14 = arith.constant dense<0.000000e+00> : vector<8x2xf32>
    %16 = tpu.matmul %14, %15, %cst_14 {dimension_numbers = #tpu.dot_dimension_numbers<[1], [0], [0], [1], [0, 0, 1, 1], [], []>} : vector<8x5xf32>, vector<5x2xf32>, vector<8x2xf32> -> vector<8x2xf32>
    %c0_15 = arith.constant 0 : index
    %c0_16 = arith.constant 0 : index
    %17 = vector.load %arg7[%c0_15, %c0_16] : memref<1x2xf32, #tpu.memory_space<vmem>>, vector<1x2xf32>
    %18 = vector.broadcast %17 : vector<1x2xf32> to vector<8x2xf32>
    %19 = arith.addf %16, %18 : vector<8x2xf32>
    %c0_17 = arith.constant 0 : index
    %c0_18 = arith.constant 0 : index
    %20 = vector.load %arg8[%c0_17, %c0_18] : memref<8x2xf32, #tpu.memory_space<vmem>>, vector<8x2xf32>
    tpu.vector_store %arg8[%c0_17, %c0_18], %19 {strides = array<i32>} : memref<8x2xf32, #tpu.memory_space<vmem>>, vector<8x2xf32>,
    return
  }
  func.func @transform_0(%arg0: i32) -> (i32, i32) {
    %c0_i32 = arith.constant 0 : i32
    %c0_i32_0 = arith.constant 0 : i32
    return %arg0, %c0_i32 : i32, i32
  }
  func.func @transform_1(%arg0: i32) -> (i32, i32) {
    %c0_i32 = arith.constant 0 : i32
    %c0_i32_0 = arith.constant 0 : i32
    %c0_i32_1 = arith.constant 0 : i32
    return %c0_i32, %c0_i32_0 : i32, i32
  }
  func.func @transform_2(%arg0: i32) -> (i32, i32) {
    %c0_i32 = arith.constant 0 : i32
    %c0_i32_0 = arith.constant 0 : i32
    %c0_i32_1 = arith.constant 0 : i32
    return %c0_i32, %c0_i32_0 : i32, i32
  }
  func.func @transform_3(%arg0: i32) -> (i32, i32) {
    %c0_i32 = arith.constant 0 : i32
    %c0_i32_0 = arith.constant 0 : i32
    %c0_i32_1 = arith.constant 0 : i32
    return %c0_i32, %c0_i32_0 : i32, i32
  }
  func.func @transform_4(%arg0: i32) -> (i32, i32) {
    %c0_i32 = arith.constant 0 : i32
    %c0_i32_0 = arith.constant 0 : i32
    %c0_i32_1 = arith.constant 0 : i32
    return %c0_i32, %c0_i32_0 : i32, i32
  }
  func.func @transform_5(%arg0: i32) -> (i32, i32) {
    %c0_i32 = arith.constant 0 : i32
    %c0_i32_0 = arith.constant 0 : i32
    %c0_i32_1 = arith.constant 0 : i32
    return %c0_i32, %c0_i32_0 : i32, i32
  }
  func.func @transform_6(%arg0: i32) -> (i32, i32) {
    %c0_i32 = arith.constant 0 : i32
    %c0_i32_0 = arith.constant 0 : i32
    %c0_i32_1 = arith.constant 0 : i32
    return %c0_i32, %c0_i32_0 : i32, i32
  }
  func.func @transform_7(%arg0: i32) -> (i32, i32) {
    %c0_i32 = arith.constant 0 : i32
    %c0_i32_0 = arith.constant 0 : i32
    return %arg0, %c0_i32 : i32, i32
  }
}

</mosaic_0001>

<llo_original>
// kernel: dumbnet_forward.1
$region0: #{dumbnet_forward.1}
  #allocation0 [shape = 'u32[]', space=smem, size = 0x4, offset = 0x4, fixed_abs, tag = 'smem constant byte address 0x4 - core index']
  #allocation1 [shape = 'u32[144,128]{1,0:T(1,128)}', space=vmem, size = 0x12000, scoped, tag = 'internal scratch']
  %s0 = inlined_call_operand.vmem [shape: f32[8,4], index: 0, kind: input, shape index: {}]
  %s1 = inlined_call_operand.vmem [shape: f32[4,10], index: 1, kind: input, shape index: {}]
  %s2 = inlined_call_operand.vmem [shape: f32[1,10], index: 2, kind: input, shape index: {}]
  %s3 = inlined_call_operand.vmem [shape: f32[10,5], index: 3, kind: input, shape index: {}]
  %s4 = inlined_call_operand.vmem [shape: f32[1,5], index: 4, kind: input, shape index: {}]
  %s5 = inlined_call_operand.vmem [shape: f32[5,2], index: 5, kind: input, shape index: {}]
  %s6 = inlined_call_operand.vmem [shape: f32[1,2], index: 6, kind: input, shape index: {}]
  %s7 = inlined_call_operand.vmem [shape: f32[8,2], index: 7, kind: output, shape index: {}]
  %s8 = sld [smem:[#allocation0]]
  $region38: #{dumbnet_forward.1} parent=0
    _
  %s10 = ssub.s32 1, %s8
  %s11 = scalar_select 0, %s10, %s8
  // Predicated region
  $region2: #{dumbnet_forward.1} parent=0 // pred_check
    _
  $region3: #{dumbnet_forward.1} parent=0 // pred_check_branch
    %13 = sbr.rel (0) target = $region5
  $region4: #{dumbnet_forward.1} parent=0 // pred_region
    _
  $region5: #{dumbnet_forward.1} parent=0 // pred_fallthru
    _
  // Predicated region
  $region6: #{dumbnet_forward.1} parent=0 // pred_check
    _
  $region7: #{dumbnet_forward.1} parent=0 // pred_check_branch
    %15 = sbr.rel (0) target = $region9
  $region8: #{dumbnet_forward.1} parent=0 // pred_region
    _
  $region9: #{dumbnet_forward.1} parent=0 // pred_fallthru
    _
  // Predicated region
  $region10: #{dumbnet_forward.1} parent=0 // pred_check
    _
  $region11: #{dumbnet_forward.1} parent=0 // pred_check_branch
    %17 = sbr.rel (0) target = $region13
  $region12: #{dumbnet_forward.1} parent=0 // pred_region
    _
  $region13: #{dumbnet_forward.1} parent=0 // pred_fallthru
    _
  // Predicated region
  $region14: #{dumbnet_forward.1} parent=0 // pred_check
    _
  $region15: #{dumbnet_forward.1} parent=0 // pred_check_branch
    %19 = sbr.rel (0) target = $region17
  $region16: #{dumbnet_forward.1} parent=0 // pred_region
    _
  $region17: #{dumbnet_forward.1} parent=0 // pred_fallthru
    _
  // Predicated region
  $region18: #{dumbnet_forward.1} parent=0 // pred_check
    _
  $region19: #{dumbnet_forward.1} parent=0 // pred_check_branch
    %21 = sbr.rel (0) target = $region21
  $region20: #{dumbnet_forward.1} parent=0 // pred_region
    _
  $region21: #{dumbnet_forward.1} parent=0 // pred_fallthru
    _
  // Predicated region
  $region22: #{dumbnet_forward.1} parent=0 // pred_check
    _
  $region23: #{dumbnet_forward.1} parent=0 // pred_check_branch
    %23 = sbr.rel (0) target = $region25
  $region24: #{dumbnet_forward.1} parent=0 // pred_region
    _
  $region25: #{dumbnet_forward.1} parent=0 // pred_fallthru
    _
  // Predicated region
  $region26: #{dumbnet_forward.1} parent=0 // pred_check
    _
  $region27: #{dumbnet_forward.1} parent=0 // pred_check_branch
    %25 = sbr.rel (0) target = $region29
  $region28: #{dumbnet_forward.1} parent=0 // pred_region
    _
  $region29: #{dumbnet_forward.1} parent=0 // pred_fallthru
    _
  %v26 = vld [vmem:[%s0] sm:$0xff]
  %v27 = vld [vmem:[%s1] sm:$0xf]
  %v28 = vld [vmem:[%s2] sm:$0x1]
  %v30 = vlaneseq
  %v31 = vshrl.u32 %v30, 7
  %v32 = vsub.s32 0, %v31
  %v33 = vrot.slane %v28, %v32
  %vm35 = vcmask 31744
  %v37 = vsel %vm35, %v26, 0
  %vm39 = vcmask 1043456
  %v41 = vsel %vm39, %v27, 0
  %43 = vmatprep.subr.mxu0 0.0
  %44 = vmatpush1.msra.mxu0 0.0
  %45 = vmatprep.subr.mxu0 0.0
  %46 = vmatpush1.msra.mxu0 0.0
  %47 = vmatprep.subr.mxu0 0.0
  %48 = vmatpush1.msra.mxu0 0.0
  %49 = vmatprep.subr.mxu0 0.0
  %50 = vmatpush1.msra.mxu0 0.0
  %51 = vmatprep.subr.mxu0 0.0
  %52 = vmatpush1.msra.mxu0 0.0
  %53 = vmatprep.subr.mxu0 0.0
  %54 = vmatpush1.msra.mxu0 0.0
  %55 = vmatprep.subr.mxu0 0.0
  %56 = vmatpush1.msra.mxu0 0.0
  %57 = vmatprep.subr.mxu0 0.0
  %58 = vmatpush1.msra.mxu0 0.0
  %59 = vmatprep.subr.mxu0 0.0
  %60 = vmatpush1.msra.mxu0 0.0
  %61 = vmatprep.subr.mxu0 0.0
  %62 = vmatpush1.msra.mxu0 0.0
  %63 = vmatprep.subr.mxu0 0.0
  %64 = vmatpush1.msra.mxu0 0.0
  %65 = vmatprep.subr.mxu0 0.0
  %66 = vmatpush1.msra.mxu0 0.0
  %67 = vmatprep.subr.mxu0 0.0
  %68 = vmatpush1.msra.mxu0 0.0
  %69 = vmatprep.subr.mxu0 0.0
  %70 = vmatpush1.msra.mxu0 0.0
  %71 = vmatprep.subr.mxu0 0.0
  %72 = vmatpush1.msra.mxu0 0.0
  %73 = vmatprep.subr.mxu0 0.0
  %74 = vmatpush1.msra.mxu0 %v41
  %75 = vmatprep.subr.mxu0 0.0
  %76 = vmatpush2.msra.mxu0 0.0
  %77 = vmatprep.subr.mxu0 0.0
  %78 = vmatpush2.msra.mxu0 0.0
  %79 = vmatprep.subr.mxu0 0.0
  %80 = vmatpush2.msra.mxu0 0.0
  %81 = vmatprep.subr.mxu0 0.0
  %82 = vmatpush2.msra.mxu0 0.0
  %83 = vmatprep.subr.mxu0 0.0
  %84 = vmatpush2.msra.mxu0 0.0
  %85 = vmatprep.subr.mxu0 0.0
  %86 = vmatpush2.msra.mxu0 0.0
  %87 = vmatprep.subr.mxu0 0.0
  %88 = vmatpush2.msra.mxu0 0.0
  %89 = vmatprep.subr.mxu0 0.0
  %90 = vmatpush2.msra.mxu0 0.0
  %91 = vmatprep.subr.mxu0 0.0
  %92 = vmatpush2.msra.mxu0 0.0
  %93 = vmatprep.subr.mxu0 0.0
  %94 = vmatpush2.msra.mxu0 0.0
  %95 = vmatprep.subr.mxu0 0.0
  %96 = vmatpush2.msra.mxu0 0.0
  %97 = vmatprep.subr.mxu0 0.0
  %98 = vmatpush2.msra.mxu0 0.0
  %99 = vmatprep.subr.mxu0 0.0
  %100 = vmatpush2.msra.mxu0 0.0
  %101 = vmatprep.subr.mxu0 0.0
  %102 = vmatpush2.msra.mxu0 0.0
  %103 = vmatprep.subr.mxu0 0.0
  %104 = vmatpush2.msra.mxu0 0.0
  %105 = vmatprep.subr.mxu0 0.0
  %106 = vmatpush2.msra.mxu0 0.0
  %107 = vmatprep.mubr.f32.mxu0 0.0
  %108 = vmatmul.mubr.f32.gmra.mxu0 %v37
  %v109 = vpop.f32.mrf.mxu0
  %v110 = vadd.f32 %v33, %v109
  %v111 = vpop.f32.mrf.mxu0
  %112 = vdwg.mxu0
  %v113 = vmax.f32 %v110, 0.0
  %v114 = vld [vmem:[%s3] sm:$0xff]
  %v115 = vld [vmem:[%s3 + $0x8] sm:$0x3]
  %v116 = vld [vmem:[%s4] sm:$0x1]
  %v118 = vlaneseq
  %v119 = vshrl.u32 %v118, 7
  %v120 = vsub.s32 0, %v119
  %v121 = vrot.slane %v116, %v120
  %vm123 = vcmask 80896
  %v125 = vsel %vm123, %v113, 0
  %vm127 = vcmask 1041408
  %v129 = vsel %vm127, %v115, 0
  %131 = vmatprep.subr.mxu0 0.0
  %132 = vmatpush1.msra.mxu0 0.0
  %133 = vmatprep.subr.mxu0 0.0
  %134 = vmatpush1.msra.mxu0 0.0
  %135 = vmatprep.subr.mxu0 0.0
  %136 = vmatpush1.msra.mxu0 0.0
  %137 = vmatprep.subr.mxu0 0.0
  %138 = vmatpush1.msra.mxu0 0.0
  %139 = vmatprep.subr.mxu0 0.0
  %140 = vmatpush1.msra.mxu0 0.0
  %141 = vmatprep.subr.mxu0 0.0
  %142 = vmatpush1.msra.mxu0 0.0
  %143 = vmatprep.subr.mxu0 0.0
  %144 = vmatpush1.msra.mxu0 0.0
  %145 = vmatprep.subr.mxu0 0.0
  %146 = vmatpush1.msra.mxu0 0.0
  %147 = vmatprep.subr.mxu0 0.0
  %148 = vmatpush1.msra.mxu0 0.0
  %149 = vmatprep.subr.mxu0 0.0
  %150 = vmatpush1.msra.mxu0 0.0
  %151 = vmatprep.subr.mxu0 0.0
  %152 = vmatpush1.msra.mxu0 0.0
  %153 = vmatprep.subr.mxu0 0.0
  %154 = vmatpush1.msra.mxu0 0.0
  %155 = vmatprep.subr.mxu0 0.0
  %156 = vmatpush1.msra.mxu0 0.0
  %157 = vmatprep.subr.mxu0 0.0
  %158 = vmatpush1.msra.mxu0 0.0
  %159 = vmatprep.subr.mxu0 0.0
  %160 = vmatpush1.msra.mxu0 %v129
  %161 = vmatprep.subr.mxu0 0.0
  %162 = vmatpush1.msra.mxu0 %v114
  %163 = vmatprep.subr.mxu0 0.0
  %164 = vmatpush2.msra.mxu0 0.0
  %165 = vmatprep.subr.mxu0 0.0
  %166 = vmatpush2.msra.mxu0 0.0
  %167 = vmatprep.subr.mxu0 0.0
  %168 = vmatpush2.msra.mxu0 0.0
  %169 = vmatprep.subr.mxu0 0.0
  %170 = vmatpush2.msra.mxu0 0.0
  %171 = vmatprep.subr.mxu0 0.0
  %172 = vmatpush2.msra.mxu0 0.0
  %173 = vmatprep.subr.mxu0 0.0
  %174 = vmatpush2.msra.mxu0 0.0
  %175 = vmatprep.subr.mxu0 0.0
  %176 = vmatpush2.msra.mxu0 0.0
  %177 = vmatprep.subr.mxu0 0.0
  %178 = vmatpush2.msra.mxu0 0.0
  %179 = vmatprep.subr.mxu0 0.0
  %180 = vmatpush2.msra.mxu0 0.0
  %181 = vmatprep.subr.mxu0 0.0
  %182 = vmatpush2.msra.mxu0 0.0
  %183 = vmatprep.subr.mxu0 0.0
  %184 = vmatpush2.msra.mxu0 0.0
  %185 = vmatprep.subr.mxu0 0.0
  %186 = vmatpush2.msra.mxu0 0.0
  %187 = vmatprep.subr.mxu0 0.0
  %188 = vmatpush2.msra.mxu0 0.0
  %189 = vmatprep.subr.mxu0 0.0
  %190 = vmatpush2.msra.mxu0 0.0
  %191 = vmatprep.subr.mxu0 0.0
  %192 = vmatpush2.msra.mxu0 0.0
  %193 = vmatprep.subr.mxu0 0.0
  %194 = vmatpush2.msra.mxu0 0.0
  %195 = vmatprep.mubr.f32.mxu0 0.0
  %196 = vmatmul.mubr.f32.gmra.mxu0 %v125
  %v197 = vpop.f32.mrf.mxu0
  %v198 = vadd.f32 %v121, %v197
  %v199 = vpop.f32.mrf.mxu0
  %200 = vdwg.mxu0
  %v201 = vmax.f32 %v198, 0.0
  %v202 = vld [vmem:[%s5] sm:$0x1f]
  %v203 = vld [vmem:[%s6] sm:$0x1]
  %v205 = vlaneseq
  %v206 = vshrl.u32 %v205, 7
  %v207 = vsub.s32 0, %v206
  %v208 = vrot.slane %v203, %v207
  %vm210 = vcmask 39936
  %v212 = vsel %vm210, %v201, 0
  %vm214 = vcmask 1044480
  %v216 = vsel %vm214, %v202, 0
  %218 = vmatprep.subr.mxu0 0.0
  %219 = vmatpush1.msra.mxu0 0.0
  %220 = vmatprep.subr.mxu0 0.0
  %221 = vmatpush1.msra.mxu0 0.0
  %222 = vmatprep.subr.mxu0 0.0
  %223 = vmatpush1.msra.mxu0 0.0
  %224 = vmatprep.subr.mxu0 0.0
  %225 = vmatpush1.msra.mxu0 0.0
  %226 = vmatprep.subr.mxu0 0.0
  %227 = vmatpush1.msra.mxu0 0.0
  %228 = vmatprep.subr.mxu0 0.0
  %229 = vmatpush1.msra.mxu0 0.0
  %230 = vmatprep.subr.mxu0 0.0
  %231 = vmatpush1.msra.mxu0 0.0
  %232 = vmatprep.subr.mxu0 0.0
  %233 = vmatpush1.msra.mxu0 0.0
  %234 = vmatprep.subr.mxu0 0.0
  %235 = vmatpush1.msra.mxu0 0.0
  %236 = vmatprep.subr.mxu0 0.0
  %237 = vmatpush1.msra.mxu0 0.0
  %238 = vmatprep.subr.mxu0 0.0
  %239 = vmatpush1.msra.mxu0 0.0
  %240 = vmatprep.subr.mxu0 0.0
  %241 = vmatpush1.msra.mxu0 0.0
  %242 = vmatprep.subr.mxu0 0.0
  %243 = vmatpush1.msra.mxu0 0.0
  %244 = vmatprep.subr.mxu0 0.0
  %245 = vmatpush1.msra.mxu0 0.0
  %246 = vmatprep.subr.mxu0 0.0
  %247 = vmatpush1.msra.mxu0 0.0
  %248 = vmatprep.subr.mxu0 0.0
  %249 = vmatpush1.msra.mxu0 %v216
  %250 = vmatprep.subr.mxu0 0.0
  %251 = vmatpush2.msra.mxu0 0.0
  %252 = vmatprep.subr.mxu0 0.0
  %253 = vmatpush2.msra.mxu0 0.0
  %254 = vmatprep.subr.mxu0 0.0
  %255 = vmatpush2.msra.mxu0 0.0
  %256 = vmatprep.subr.mxu0 0.0
  %257 = vmatpush2.msra.mxu0 0.0
  %258 = vmatprep.subr.mxu0 0.0
  %259 = vmatpush2.msra.mxu0 0.0
  %260 = vmatprep.subr.mxu0 0.0
  %261 = vmatpush2.msra.mxu0 0.0
  %262 = vmatprep.subr.mxu0 0.0
  %263 = vmatpush2.msra.mxu0 0.0
  %264 = vmatprep.subr.mxu0 0.0
  %265 = vmatpush2.msra.mxu0 0.0
  %266 = vmatprep.subr.mxu0 0.0
  %267 = vmatpush2.msra.mxu0 0.0
  %268 = vmatprep.subr.mxu0 0.0
  %269 = vmatpush2.msra.mxu0 0.0
  %270 = vmatprep.subr.mxu0 0.0
  %271 = vmatpush2.msra.mxu0 0.0
  %272 = vmatprep.subr.mxu0 0.0
  %273 = vmatpush2.msra.mxu0 0.0
  %274 = vmatprep.subr.mxu0 0.0
  %275 = vmatpush2.msra.mxu0 0.0
  %276 = vmatprep.subr.mxu0 0.0
  %277 = vmatpush2.msra.mxu0 0.0
  %278 = vmatprep.subr.mxu0 0.0
  %279 = vmatpush2.msra.mxu0 0.0
  %280 = vmatprep.subr.mxu0 0.0
  %281 = vmatpush2.msra.mxu0 0.0
  %282 = vmatprep.mubr.f32.mxu0 0.0
  %283 = vmatmul.mubr.f32.gmra.mxu0 %v212
  %v284 = vpop.f32.mrf.mxu0
  %v285 = vadd.f32 %v208, %v284
  %v286 = vpop.f32.mrf.mxu0
  %287 = vdwg.mxu0
  %vm288 = vcmask 15360
  %289 = vst.msk [vmem:[%s7] sm:$0xff] %vm288, %v285
  // Predicated region
  $region30: #{dumbnet_forward.1} parent=0 // pred_check
    _
  $region31: #{dumbnet_forward.1} parent=0 // pred_check_branch
    %291 = sbr.rel (0) target = $region33
  $region32: #{dumbnet_forward.1} parent=0 // pred_region
    _
  $region33: #{dumbnet_forward.1} parent=0 // pred_fallthru
    _
  // Predicated region
  $region34: #{dumbnet_forward.1} parent=0 // pred_check
    _
  $region35: #{dumbnet_forward.1} parent=0 // pred_check_branch
    %293 = sbr.rel (0) target = $region37
  $region36: #{dumbnet_forward.1} parent=0 // pred_region
    _
  $region37: #{dumbnet_forward.1} parent=0 // pred_fallthru
    _

</llo_original>
